<compile_context>
chip_gen: v5e
topology: v5e:2x2
jax: 0.10.0
libtpu: 0.0.40
codegen_flags: <defaults>
</compile_context>

<pallas_src>
import math
import functools

import jax
import jax.numpy as jnp
from jax import lax
from jax.experimental import pallas as pl
from jax.experimental.pallas import tpu as pltpu


def _round_up(x: int, m: int) -> int:
    return ((x + m - 1) // m) * m


# ---------------------------------------------------------------------------
# Path A: small vocab -> whole table resident in VMEM, one-hot MXU gather.
# ---------------------------------------------------------------------------
def _embed_onehot_kernel(ids_ref, tab_ref, o_ref, *, scale):
    # ids_ref : (TOK_BLOCK, 1) int32 token ids for this block
    # tab_ref : (vocab, emb)   whole table (same block index every step -> stays
    #                          resident in VMEM, fetched from HBM only once)
    # o_ref   : (TOK_BLOCK, emb)
    ids = ids_ref[...]                                        # (T, 1) int32
    tok_block = ids.shape[0]
    vocab = tab_ref.shape[0]
    cols = lax.broadcasted_iota(jnp.int32, (tok_block, vocab), 1)
    onehot = (cols == ids).astype(jnp.float32)                # (T, vocab)
    # HIGHEST precision => the row-select matmul is (near-)exact in f32.
    rows = jnp.dot(onehot, tab_ref[...].astype(jnp.float32),
                   preferred_element_type=jnp.float32,
                   precision=lax.Precision.HIGHEST)           # (T, emb)
    o_ref[...] = (rows * scale).astype(o_ref.dtype)


def _embed_onehot(ids_pad, table, *, tok_block, scale, vmem_limit):
    n_pad = ids_pad.shape[0]
    vocab, emb = table.shape
    n_blocks = n_pad // tok_block
    ids2d = ids_pad.reshape(n_pad, 1)
    return pl.pallas_call(
        functools.partial(_embed_onehot_kernel, scale=scale),
        out_shape=jax.ShapeDtypeStruct((n_pad, emb), table.dtype),
        grid_spec=pltpu.PrefetchScalarGridSpec(
            num_scalar_prefetch=0,
            grid=(n_blocks,),
            in_specs=[
                pl.BlockSpec((tok_block, 1), lambda i: (i, 0)),
                pl.BlockSpec((vocab, emb), lambda i: (0, 0)),   # resident table
            ],
            out_specs=pl.BlockSpec((tok_block, emb), lambda i: (i, 0)),
        ),
        compiler_params=pltpu.CompilerParams(
            dimension_semantics=("parallel",),
            vmem_limit_bytes=vmem_limit,
        ),
    )(ids2d, table)


# ---------------------------------------------------------------------------
# Path B: general case -> table in HBM, manual per-row DMA gather (pattern P4).
# ---------------------------------------------------------------------------
def _embed_dma_kernel(ids_ref, tab_ref, o_ref, rows_ref, sem,
                      *, tok_block, scale):
    # ids_ref  : SMEM scalar-prefetch ref, (n_pad,) int32 (all token ids)
    # tab_ref  : (vocab, emb) ref in HBM (memory_space=pl.ANY, no auto-DMA)
    # o_ref    : (TOK_BLOCK, emb) VMEM output block
    # rows_ref : (TOK_BLOCK, emb) VMEM staging slab
    # sem      : single DMA semaphore shared by all row copies of this block
    base = pl.program_id(0) * tok_block

    # Issue all TOK_BLOCK row gathers first so the small (emb-row) DMAs are all
    # in flight concurrently (latency-bound individually, overlapped in bulk).
    def issue(t, carry):
        tok = ids_ref[base + t]
        pltpu.make_async_copy(
            tab_ref.at[pl.ds(tok, 1), :],
            rows_ref.at[pl.ds(t, 1), :],
            sem,
        ).start()
        return carry

    lax.fori_loop(0, tok_block, issue, 0)

    # Wait for all of them (each wait consumes one row-sized completion).
    def wait(t, carry):
        pltpu.make_async_copy(
            tab_ref.at[pl.ds(0, 1), :],
            rows_ref.at[pl.ds(t, 1), :],
            sem,
        ).wait()
        return carry

    lax.fori_loop(0, tok_block, wait, 0)

    # Scale in f32 (v5e VPU has no bf16 ALU), then store the whole dense slab.
    o_ref[...] = (rows_ref[...].astype(jnp.float32) * scale).astype(o_ref.dtype)


def _embed_dma(ids_pad, table, *, tok_block, scale, vmem_limit):
    n_pad = ids_pad.shape[0]
    vocab, emb = table.shape
    n_blocks = n_pad // tok_block
    return pl.pallas_call(
        functools.partial(_embed_dma_kernel, tok_block=tok_block, scale=scale),
        out_shape=jax.ShapeDtypeStruct((n_pad, emb), table.dtype),
        grid_spec=pltpu.PrefetchScalarGridSpec(
            num_scalar_prefetch=1,                       # token ids -> SMEM
            grid=(n_blocks,),
            in_specs=[pl.BlockSpec(memory_space=pl.ANY)],  # table stays in HBM
            out_specs=pl.BlockSpec((tok_block, emb), lambda i, ids: (i, 0)),
            scratch_shapes=[
                pltpu.VMEM((tok_block, emb), table.dtype),  # staging slab
                pltpu.SemaphoreType.DMA,                    # shared row-DMA sem
            ],
        ),
        compiler_params=pltpu.CompilerParams(
            dimension_semantics=("parallel",),
            vmem_limit_bytes=vmem_limit,
        ),
    )(ids_pad, table)


# ---------------------------------------------------------------------------
# Wrapper: Pallas equivalent of `nn.Embedding(vocab, emb)(tokens.long()) * sqrt(emb)`
# ---------------------------------------------------------------------------
def token_embedding(tokens: jax.Array, table: jax.Array, *,
                    tok_block: int = 256, force_path: str | None = None) -> jax.Array:
    vocab, emb = table.shape
    orig_shape = tokens.shape
    scale = math.sqrt(float(emb))

    ids = tokens.reshape(-1).astype(jnp.int32)
    if ids.shape[0] == 0:
        return jnp.zeros(orig_shape + (emb,), table.dtype)
    # nn.Embedding errors on out-of-range ids; Pallas would silently gather OOB,
    # so clamp in the wrapper for safety.
    ids = jnp.clip(ids, 0, vocab - 1)
    n_tok = ids.shape[0]

    # Sublane-aligned token block, shrunk for tiny inputs; pad ids to a whole
    # number of blocks (padding rows are sliced off below).
    tok_block = _round_up(min(tok_block, _round_up(n_tok, 8)), 8)
    n_blocks = -(-n_tok // tok_block)
    n_pad = n_blocks * tok_block
    if n_pad != n_tok:
        ids = jnp.pad(ids, (0, n_pad - n_tok))

    # Whole-table-in-VMEM one-hot gather is strictly best for small vocabularies.
    # Gate far below v7x's 64 MiB physical VMEM (output double-buffers and the
    # one-hot temporaries also need room); bigger tables use the HBM row-gather.
    table_bytes = vocab * emb * table.dtype.itemsize
    use_small = (vocab <= 512) and (table_bytes <= 2 * 1024 * 1024)
    if force_path == "dma":
        use_small = False
    elif force_path == "small":
        use_small = True

    # Explicit scoped-VMEM budget: 32 MiB is valid on v5e/v6e (128 MiB physical)
    # and v7x (64 MiB physical) and amply covers the default tile sizes.
    vmem_limit = 32 * 1024 * 1024

    if use_small:
        out = _embed_onehot(ids, table, tok_block=tok_block, scale=scale,
                            vmem_limit=vmem_limit)
    else:
        out = _embed_dma(ids, table, tok_block=tok_block, scale=scale,
                         vmem_limit=vmem_limit)

    return out[:n_tok].reshape(orig_shape + (emb,))


if __name__ == "__main__":
    # Shapes consistent with the module: small vocab/emb, (batch, seq) token ids.
    vocab_size, emb_size = 32, 128
    batch, seq = 2, 8

    key = jax.random.PRNGKey(0)
    k_tab, k_tok, k_tab2, k_tok2 = jax.random.split(key, 4)

    # nn.Embedding default init: N(0, 1).
    table = jax.random.normal(k_tab, (vocab_size, emb_size), dtype=jnp.float32)
    tokens = jax.random.randint(k_tok, (batch, seq), 0, vocab_size, dtype=jnp.int32)
    ref = jnp.take(table, tokens, axis=0) * math.sqrt(emb_size)

    # Path A (auto-selected for the small table): VMEM-resident one-hot gather.
    out = jax.block_until_ready(token_embedding(tokens, table))
    assert out.shape == (batch, seq, emb_size), out.shape
    assert jnp.allclose(out, ref, atol=1e-4, rtol=1e-4), "small-vocab path mismatch"

    # Path B (forced): HBM table + manual per-row DMA gather into a VMEM slab.
    out_dma = jax.block_until_ready(token_embedding(tokens, table, force_path="dma"))
    assert jnp.allclose(out_dma, ref, atol=1e-6, rtol=1e-6), "dma path mismatch"

    # Path B auto-selected with a larger vocab: multiple token blocks + padding
    # (192 tokens, tok_block=128 -> 2 blocks padded to 256 rows).
    vocab2, emb2 = 1000, 128
    table2 = jax.random.normal(k_tab2, (vocab2, emb2), dtype=jnp.float32)
    tokens2 = jax.random.randint(k_tok2, (2, 96), 0, vocab2, dtype=jnp.int32)
    ref2 = jnp.take(table2, tokens2, axis=0) * math.sqrt(emb2)
    out2 = jax.block_until_ready(token_embedding(tokens2, table2, tok_block=128))
    assert out2.shape == (2, 96, emb2), out2.shape
    assert jnp.allclose(out2, ref2, atol=1e-6, rtol=1e-6), "multi-block dma mismatch"

    print("KERNEL_OK")
</pallas_src>

<mosaic_0001>
module attributes {stable_mosaic.version = 11 : i64} {
  func.func @_embed_onehot_kernel(%arg0: i32, %arg1: memref<16x1xi32, #tpu.memory_space<vmem>>, %arg2: memref<32x128xf32, #tpu.memory_space<vmem>>, %arg3: memref<16x128xf32, #tpu.memory_space<vmem>>) attributes {dimension_semantics = [#tpu.dimension_semantics<parallel>], iteration_bounds = array<i64: 1>, scalar_prefetch = 0 : i64, scratch_operands = 0 : i64, tpu.core_type = #tpu.core_type<tc>, window_params = [{transform_indices = @transform_0, window_bounds = array<i64: 16, 1>}, {pipeline_mode = #tpu.pipeline_mode<synchronous>, transform_indices = @transform_1, window_bounds = array<i64: 32, 128>}, {transform_indices = @transform_2, window_bounds = array<i64: 16, 128>}]} {
    %c0 = arith.constant 0 : index
    %c0_0 = arith.constant 0 : index
    %0 = vector.load %arg1[%c0, %c0_0] : memref<16x1xi32, #tpu.memory_space<vmem>>, vector<16x1xi32>
    %1 = tpu.iota {dimensions = array<i32: 1>} : vector<16x32xi32>
    %2 = vector.broadcast %0 : vector<16x1xi32> to vector<16x32xi32>
    %3 = arith.cmpi eq, %1, %2 : vector<16x32xi32>
    %4 = arith.extui %3 : vector<16x32xi1> to vector<16x32xi32>
    %5 = arith.sitofp %4 : vector<16x32xi32> to vector<16x32xf32>
    %c0_1 = arith.constant 0 : index
    %c0_2 = arith.constant 0 : index
    %6 = vector.load %arg2[%c0_1, %c0_2] : memref<32x128xf32, #tpu.memory_space<vmem>>, vector<32x128xf32>
    %cst = arith.constant dense<0.000000e+00> : vector<16x128xf32>
    %7 = tpu.matmul %5, %6, %cst {dimension_numbers = #tpu.dot_dimension_numbers<[1], [0], [0], [1], [0, 0, 1, 1], [], []>, precision = #tpu.contract_precision<fp32>} : vector<16x32xf32>, vector<32x128xf32>, vector<16x128xf32> -> vector<16x128xf32>
    %cst_3 = arith.constant 11.3137083 : f32
    %8 = vector.broadcast %cst_3 : f32 to vector<16x128xf32>
    %9 = arith.mulf %7, %8 : vector<16x128xf32>
    %c0_4 = arith.constant 0 : index
    %c0_5 = arith.constant 0 : index
    %10 = vector.load %arg3[%c0_4, %c0_5] : memref<16x128xf32, #tpu.memory_space<vmem>>, vector<16x128xf32>
    tpu.vector_store %arg3[%c0_4, %c0_5], %9 {strides = array<i32>} : memref<16x128xf32, #tpu.memory_space<vmem>>, vector<16x128xf32>,
    return
  }
  func.func @transform_0(%arg0: i32) -> (i32, i32) {
    %c0_i32 = arith.constant 0 : i32
    %c0_i32_0 = arith.constant 0 : i32
    return %arg0, %c0_i32 : i32, i32
  }
  func.func @transform_1(%arg0: i32) -> (i32, i32) {
    %c0_i32 = arith.constant 0 : i32
    %c0_i32_0 = arith.constant 0 : i32
    %c0_i32_1 = arith.constant 0 : i32
    return %c0_i32, %c0_i32_0 : i32, i32
  }
  func.func @transform_2(%arg0: i32) -> (i32, i32) {
    %c0_i32 = arith.constant 0 : i32
    %c0_i32_0 = arith.constant 0 : i32
    return %arg0, %c0_i32 : i32, i32
  }
}

</mosaic_0001>

<llo_original>
// kernel: tpu_custom_call.1
$region0: #{tpu_custom_call.1}
  #allocation0 [shape = 'u32[]', space=smem, size = 0x4, offset = 0x4, fixed_abs, tag = 'smem constant byte address 0x4 - core index']
  #allocation1 [shape = 'u32[72,128]{1,0:T(1,128)}', space=vmem, size = 0x9000, scoped, tag = 'internal scratch']
  %s0 = inlined_call_operand.vmem [shape: s32[16,1], index: 0, kind: input, shape index: {}]
  %s1 = inlined_call_operand.hbm [shape: f32[32,128], index: 1, kind: input, shape index: {}]
  %s2 = inlined_call_operand.hbm [shape: f32[16,128], index: 2, kind: output, shape index: {}]
  %s3 = sld [smem:[#allocation0]]
  $region22: #{tpu_custom_call.1} parent=0
    _
  %s5 = ssub.s32 1, %s3
  %s6 = scalar_select 0, %s5, %s3
  $region1: #{tpu_custom_call.1} parent=0
    #allocation2 [shape = 'u8[16384]{0}', space=vmem, size = 0x4000, scoped, tag = 'input window, operand 1, single buffered']
    #allocation3 [shape = 's32[1]{0}', space=sflag, size = 0x4, scoped, tag = 'scoped memory for tpu_custom_call.1']
    #allocation4 [shape = 's32[1]{0}', space=sflag, size = 0x4, scoped, tag = 'scoped memory for tpu_custom_call.1']
    #allocation5 [shape = 'u8[8192]{0}', space=vmem, size = 0x2000, scoped, tag = 'output window, operand 0, single buffered']
    %7 = vsyncpa [#allocation3], 0
    %8 = vsyncpa [#allocation4], 0
    // Predicated region
    $region2: #{tpu_custom_call.1} parent=1 // pred_check
      _
    $region3: #{tpu_custom_call.1} parent=1 // pred_check_branch
      %10 = sbr.rel (0) target = $region5
    $region4: #{tpu_custom_call.1} parent=1 // pred_region
      _
    $region5: #{tpu_custom_call.1} parent=1 // pred_fallthru
      _
    // Predicated region
    $region6: #{tpu_custom_call.1} parent=1 // pred_check
      _
    $region7: #{tpu_custom_call.1} parent=1 // pred_check_branch
      %12 = sbr.rel (0) target = $region9
    $region8: #{tpu_custom_call.1} parent=1 // pred_region
      %14 = vsyncadd [#allocation3], 0
      %s15 = sshll.u32 %s1, 4
      %s16 = int_to_ptr.hbm [resolvable:$true] %s15
      %s17 = sshll.u32 [#allocation2], 4
      %s18 = int_to_ptr.vmem [resolvable:$true] %s17
      %23 = dma.hbm_to_vmem [thread:$0]  %s16, 512, %s18, [#allocation3], 128, 128, 8
    $region9: #{tpu_custom_call.1} parent=1 // pred_fallthru
      _
    // Predicated region
    $region10: #{tpu_custom_call.1} parent=1 // pred_check
      _
    $region11: #{tpu_custom_call.1} parent=1 // pred_check_branch
      %25 = sbr.rel (0) target = $region13
    $region12: #{tpu_custom_call.1} parent=1 // pred_region
      %27 = dma.done [#allocation3], 512
    $region13: #{tpu_custom_call.1} parent=1 // pred_fallthru
      _
    %v28 = vld [vmem:[%s0] sm:$0xff]
    %v29 = vld [vmem:[%s0 + $0x8] sm:$0xff]
    %v30 = vlaneseq
    %v31 = vand.u32 %v30, 127
    %32 = vset.pattern.permute.xlu0 0
    %33 = vperm.xlu0 %32, %v28
    %v34 = vpop.permute.xlu0 %33
    %35 = vset.pattern.permute.xlu0 0
    %36 = vperm.xlu0 %35, %v29
    %v37 = vpop.permute.xlu0 %36
    %vm38 = vcmp.eq.s32.totalorder %v31, %v34
    %vm39 = vcmp.eq.s32.totalorder %v31, %v37
    %v40 = vsel %vm38, 1, 0
    %v41 = vsel %vm39, 1, 0
    %v42 = vcvt.s32.f32 %v40
    %v43 = vcvt.s32.f32 %v41
    %v44 = vld [vmem:[#allocation2] sm:$0xff]
    %v45 = vld [vmem:[#allocation2 + $0x8] sm:$0xff]
    %v46 = vld [vmem:[#allocation2 + $0x10] sm:$0xff]
    %v47 = vld [vmem:[#allocation2 + $0x18] sm:$0xff]
    %vm48 = vcmask 261120
    %v50 = vsel %vm48, %v42, 0
    %v53 = vsel %vm48, %v43, 0
    %55 = vmatpush.msra.mxu0 0.0
    %56 = vmatpush.msra.mxu0 0.0
    %57 = vmatpush.msra.mxu0 0.0
    %58 = vmatpush.msra.mxu0 0.0
    %59 = vmatpush.msra.mxu0 0.0
    %60 = vmatpush.msra.mxu0 0.0
    %61 = vmatpush.msra.mxu0 0.0
    %62 = vmatpush.msra.mxu0 0.0
    %63 = vmatpush.msra.mxu0 0.0
    %64 = vmatpush.msra.mxu0 0.0
    %65 = vmatpush.msra.mxu0 0.0
    %66 = vmatpush.msra.mxu0 0.0
    %v67 = vand.u32 %v47, 4294901760
    %68 = vmatpush.msra.mxu0 %v67
    %v69 = vand.u32 %v46, 4294901760
    %70 = vmatpush.msra.mxu0 %v69
    %v71 = vand.u32 %v45, 4294901760
    %72 = vmatpush.msra.mxu0 %v71
    %v73 = vand.u32 %v44, 4294901760
    %74 = vmatpush.msra.mxu0 %v73
    %v75 = vand.u32 %v50, 4294901760
    %v76 = vsub.f32 %v50, %v75
    %v77 = vand.u32 %v76, 4294901760
    %v78 = vsub.f32 %v76, %v77
    %v79 = vand.u32 %v78, 4294901760
    %80 = vmatmul.f32.gmra.mxu0 %v79
    %v81 = vpop.f32.mrf.mxu0
    %v82 = vadd.f32 0.0, %v81
    %v83 = vand.u32 %v53, 4294901760
    %v84 = vsub.f32 %v53, %v83
    %v85 = vand.u32 %v84, 4294901760
    %v86 = vsub.f32 %v84, %v85
    %v87 = vand.u32 %v86, 4294901760
    %88 = vmatmul.f32.gmra.mxu0 %v87
    %v89 = vpop.f32.mrf.mxu0
    %v90 = vadd.f32 0.0, %v89
    %91 = vdwg.mxu0
    %92 = vmatpush.msra.mxu0 0.0
    %93 = vmatpush.msra.mxu0 0.0
    %94 = vmatpush.msra.mxu0 0.0
    %95 = vmatpush.msra.mxu0 0.0
    %96 = vmatpush.msra.mxu0 0.0
    %97 = vmatpush.msra.mxu0 0.0
    %98 = vmatpush.msra.mxu0 0.0
    %99 = vmatpush.msra.mxu0 0.0
    %100 = vmatpush.msra.mxu0 0.0
    %101 = vmatpush.msra.mxu0 0.0
    %102 = vmatpush.msra.mxu0 0.0
    %103 = vmatpush.msra.mxu0 0.0
    %v104 = vand.u32 %v47, 4294901760
    %v105 = vsub.f32 %v47, %v104
    %v106 = vand.u32 %v105, 4294901760
    %v107 = vsub.f32 %v105, %v106
    %v108 = vand.u32 %v107, 4294901760
    %109 = vmatpush.msra.mxu0 %v108
    %v110 = vand.u32 %v46, 4294901760
    %v111 = vsub.f32 %v46, %v110
    %v112 = vand.u32 %v111, 4294901760
    %v113 = vsub.f32 %v111, %v112
    %v114 = vand.u32 %v113, 4294901760
    %115 = vmatpush.msra.mxu0 %v114
    %v116 = vand.u32 %v45, 4294901760
    %v117 = vsub.f32 %v45, %v116
    %v118 = vand.u32 %v117, 4294901760
    %v119 = vsub.f32 %v117, %v118
    %v120 = vand.u32 %v119, 4294901760
    %121 = vmatpush.msra.mxu0 %v120
    %v122 = vand.u32 %v44, 4294901760
    %v123 = vsub.f32 %v44, %v122
    %v124 = vand.u32 %v123, 4294901760
    %v125 = vsub.f32 %v123, %v124
    %v126 = vand.u32 %v125, 4294901760
    %127 = vmatpush.msra.mxu0 %v126
    %v128 = vand.u32 %v50, 4294901760
    %129 = vmatmul.f32.gmra.mxu0 %v128
    %v130 = vpop.f32.mrf.mxu0
    %v131 = vadd.f32 %v82, %v130
    %v132 = vand.u32 %v53, 4294901760
    %133 = vmatmul.f32.gmra.mxu0 %v132
    %v134 = vpop.f32.mrf.mxu0
    %v135 = vadd.f32 %v90, %v134
    %136 = vdwg.mxu0
    %137 = vmatpush.msra.mxu0 0.0
    %138 = vmatpush.msra.mxu0 0.0
    %139 = vmatpush.msra.mxu0 0.0
    %140 = vmatpush.msra.mxu0 0.0
    %141 = vmatpush.msra.mxu0 0.0
    %142 = vmatpush.msra.mxu0 0.0
    %143 = vmatpush.msra.mxu0 0.0
    %144 = vmatpush.msra.mxu0 0.0
    %145 = vmatpush.msra.mxu0 0.0
    %146 = vmatpush.msra.mxu0 0.0
    %147 = vmatpush.msra.mxu0 0.0
    %148 = vmatpush.msra.mxu0 0.0
    %v149 = vand.u32 %v47, 4294901760
    %v150 = vsub.f32 %v47, %v149
    %151 = vmatpush.msra.mxu0 %v150
    %v152 = vand.u32 %v46, 4294901760
    %v153 = vsub.f32 %v46, %v152
    %154 = vmatpush.msra.mxu0 %v153
    %v155 = vand.u32 %v45, 4294901760
    %v156 = vsub.f32 %v45, %v155
    %157 = vmatpush.msra.mxu0 %v156
    %v158 = vand.u32 %v44, 4294901760
    %v159 = vsub.f32 %v44, %v158
    %160 = vmatpush.msra.mxu0 %v159
    %v161 = vand.u32 %v50, 4294901760
    %v162 = vsub.f32 %v50, %v161
    %163 = vmatmul.f32.gmra.mxu0 %v162
    %v164 = vpop.f32.mrf.mxu0
    %v165 = vadd.f32 %v131, %v164
    %v166 = vand.u32 %v53, 4294901760
    %v167 = vsub.f32 %v53, %v166
    %168 = vmatmul.f32.gmra.mxu0 %v167
    %v169 = vpop.f32.mrf.mxu0
    %v170 = vadd.f32 %v135, %v169
    %171 = vdwg.mxu0
    %172 = vmatpush.msra.mxu0 0.0
    %173 = vmatpush.msra.mxu0 0.0
    %174 = vmatpush.msra.mxu0 0.0
    %175 = vmatpush.msra.mxu0 0.0
    %176 = vmatpush.msra.mxu0 0.0
    %177 = vmatpush.msra.mxu0 0.0
    %178 = vmatpush.msra.mxu0 0.0
    %179 = vmatpush.msra.mxu0 0.0
    %180 = vmatpush.msra.mxu0 0.0
    %181 = vmatpush.msra.mxu0 0.0
    %182 = vmatpush.msra.mxu0 0.0
    %183 = vmatpush.msra.mxu0 0.0
    %v184 = vand.u32 %v47, 4294901760
    %185 = vmatpush.msra.mxu0 %v184
    %v186 = vand.u32 %v46, 4294901760
    %187 = vmatpush.msra.mxu0 %v186
    %v188 = vand.u32 %v45, 4294901760
    %189 = vmatpush.msra.mxu0 %v188
    %v190 = vand.u32 %v44, 4294901760
    %191 = vmatpush.msra.mxu0 %v190
    %v192 = vand.u32 %v50, 4294901760
    %v193 = vsub.f32 %v50, %v192
    %v194 = vand.u32 %v193, 4294901760
    %195 = vmatmul.f32.gmra.mxu0 %v194
    %v196 = vpop.f32.mrf.mxu0
    %v197 = vadd.f32 %v165, %v196
    %v198 = vand.u32 %v53, 4294901760
    %v199 = vsub.f32 %v53, %v198
    %v200 = vand.u32 %v199, 4294901760
    %201 = vmatmul.f32.gmra.mxu0 %v200
    %v202 = vpop.f32.mrf.mxu0
    %v203 = vadd.f32 %v170, %v202
    %204 = vdwg.mxu0
    %205 = vmatpush.msra.mxu0 0.0
    %206 = vmatpush.msra.mxu0 0.0
    %207 = vmatpush.msra.mxu0 0.0
    %208 = vmatpush.msra.mxu0 0.0
    %209 = vmatpush.msra.mxu0 0.0
    %210 = vmatpush.msra.mxu0 0.0
    %211 = vmatpush.msra.mxu0 0.0
    %212 = vmatpush.msra.mxu0 0.0
    %213 = vmatpush.msra.mxu0 0.0
    %214 = vmatpush.msra.mxu0 0.0
    %215 = vmatpush.msra.mxu0 0.0
    %216 = vmatpush.msra.mxu0 0.0
    %v217 = vand.u32 %v47, 4294901760
    %v218 = vsub.f32 %v47, %v217
    %v219 = vand.u32 %v218, 4294901760
    %220 = vmatpush.msra.mxu0 %v219
    %v221 = vand.u32 %v46, 4294901760
    %v222 = vsub.f32 %v46, %v221
    %v223 = vand.u32 %v222, 4294901760
    %224 = vmatpush.msra.mxu0 %v223
    %v225 = vand.u32 %v45, 4294901760
    %v226 = vsub.f32 %v45, %v225
    %v227 = vand.u32 %v226, 4294901760
    %228 = vmatpush.msra.mxu0 %v227
    %v229 = vand.u32 %v44, 4294901760
    %v230 = vsub.f32 %v44, %v229
    %v231 = vand.u32 %v230, 4294901760
    %232 = vmatpush.msra.mxu0 %v231
    %v233 = vand.u32 %v50, 4294901760
    %234 = vmatmul.f32.gmra.mxu0 %v233
    %v235 = vpop.f32.mrf.mxu0
    %v236 = vadd.f32 %v197, %v235
    %v237 = vand.u32 %v53, 4294901760
    %238 = vmatmul.f32.gmra.mxu0 %v237
    %v239 = vpop.f32.mrf.mxu0
    %v240 = vadd.f32 %v203, %v239
    %241 = vdwg.mxu0
    %242 = vmatpush.msra.mxu0 0.0
    %243 = vmatpush.msra.mxu0 0.0
    %244 = vmatpush.msra.mxu0 0.0
    %245 = vmatpush.msra.mxu0 0.0
    %246 = vmatpush.msra.mxu0 0.0
    %247 = vmatpush.msra.mxu0 0.0
    %248 = vmatpush.msra.mxu0 0.0
    %249 = vmatpush.msra.mxu0 0.0
    %250 = vmatpush.msra.mxu0 0.0
    %251 = vmatpush.msra.mxu0 0.0
    %252 = vmatpush.msra.mxu0 0.0
    %253 = vmatpush.msra.mxu0 0.0
    %v254 = vand.u32 %v47, 4294901760
    %255 = vmatpush.msra.mxu0 %v254
    %v256 = vand.u32 %v46, 4294901760
    %257 = vmatpush.msra.mxu0 %v256
    %v258 = vand.u32 %v45, 4294901760
    %259 = vmatpush.msra.mxu0 %v258
    %v260 = vand.u32 %v44, 4294901760
    %261 = vmatpush.msra.mxu0 %v260
    %v262 = vand.u32 %v50, 4294901760
    %263 = vmatmul.f32.gmra.mxu0 %v262
    %v264 = vpop.f32.mrf.mxu0
    %v265 = vadd.f32 %v236, %v264
    %v266 = vand.u32 %v53, 4294901760
    %267 = vmatmul.f32.gmra.mxu0 %v266
    %v268 = vpop.f32.mrf.mxu0
    %v269 = vadd.f32 %v240, %v268
    %270 = vdwg.mxu0
    %v271 = vmul.f32 %v265, 11.313708
    %v272 = vmul.f32 %v269, 11.313708
    %273 = vst [vmem:[#allocation5] sm:$0xff] %v271
    %274 = vst [vmem:[#allocation5 + $0x8] sm:$0xff] %v272
    // Predicated region
    $region14: #{tpu_custom_call.1} parent=1 // pred_check
      _
    $region15: #{tpu_custom_call.1} parent=1 // pred_check_branch
      %276 = sbr.rel (0) target = $region17
    $region16: #{tpu_custom_call.1} parent=1 // pred_region
      %278 = vsyncadd [#allocation4], 0
      %s279 = sshll.u32 [#allocation5], 4
      %s280 = int_to_ptr.vmem [resolvable:$true] %s279
      %s281 = sshll.u32 %s2, 4
      %s282 = int_to_ptr.hbm [resolvable:$true] %s281
      %287 = dma.vmem_to_hbm [thread:$0]  %s280, 256, %s282, [#allocation4], 128, 128, 8
    $region17: #{tpu_custom_call.1} parent=1 // pred_fallthru
      _
    // Predicated region
    $region18: #{tpu_custom_call.1} parent=1 // pred_check
      _
    $region19: #{tpu_custom_call.1} parent=1 // pred_check_branch
      %289 = sbr.rel (0) target = $region21
    $region20: #{tpu_custom_call.1} parent=1 // pred_region
      %291 = dma.done [#allocation4], 256
    $region21: #{tpu_custom_call.1} parent=1 // pred_fallthru
      _
    %292 = vsyncpa [#allocation3], 1
    %293 = vsyncpa [#allocation4], 1

</llo_original>
